<compile_context>
chip_gen: v5e
topology: v5e:2x2
jax: 0.10.0
libtpu: 0.0.40
codegen_flags: <defaults>
</compile_context>

<pallas_src>
import functools

import jax
import jax.numpy as jnp
from jax.experimental import pallas as pl
from jax.experimental.pallas import tpu as pltpu


# -----------------------------------------------------------------------------
# Fused MLP kernel: refs = (x, w1, b1, w2, b2, ..., wn, bn, out)
# -----------------------------------------------------------------------------
def _fused_mlp_kernel(*refs, num_layers):
    x_ref = refs[0]
    o_ref = refs[-1]
    wb = refs[1:-1]

    h = x_ref[...]
    for l in range(num_layers):
        w = wb[2 * l][...]          # (in_pad, out_pad), VMEM-resident
        b = wb[2 * l + 1][...]      # (1, out_pad) -> broadcasts over batch tile
        h = jnp.dot(h, w, preferred_element_type=jnp.float32) + b
        if l < num_layers - 1:      # hidden layers get ReLU, output layer does not
            h = jnp.maximum(h, 0.0)
    o_ref[...] = h.astype(o_ref.dtype)


# -----------------------------------------------------------------------------
# Wrapper
# -----------------------------------------------------------------------------
def _round_up(x, m):
    return ((x + m - 1) // m) * m


@functools.partial(jax.jit, static_argnames=("output_dim", "tb_max"))
def deep_layer_forward(x, ws_p, bs_p, *, output_dim, tb_max=256):
    """Forward pass identical to DeepLayer.forward.

    x:    (B, in_dim) float32
    ws_p: tuple of padded (in_pad, out_pad) weights (already transposed)
    bs_p: tuple of padded (1, out_pad) biases
    """
    B, Din = x.shape
    num_layers = len(ws_p)
    din_pad = ws_p[0].shape[0]
    out_pad = ws_p[-1].shape[1]

    # Batch tiling: sublane-aligned tile, full pipelining for large batches.
    B8 = _round_up(B, 8)
    TB = min(tb_max, B8)
    B_pad = _round_up(B8, TB)

    # Zero-pad the input into the lane/sublane-aligned slab.
    x_p = jnp.zeros((B_pad, din_pad), x.dtype).at[:B, :Din].set(x)

    in_specs = [pl.BlockSpec((TB, din_pad), lambda i: (i, 0))]
    flat_inputs = [x_p]
    for w, b in zip(ws_p, bs_p):
        # Constant block index -> weights/biases stay resident across the grid.
        in_specs.append(pl.BlockSpec(w.shape, lambda i: (0, 0)))
        in_specs.append(pl.BlockSpec(b.shape, lambda i: (0, 0)))
        flat_inputs.append(w)
        flat_inputs.append(b)

    kernel = functools.partial(_fused_mlp_kernel, num_layers=num_layers)
    out_p = pl.pallas_call(
        kernel,
        out_shape=jax.ShapeDtypeStruct((B_pad, out_pad), x.dtype),
        grid=(B_pad // TB,),
        in_specs=in_specs,
        out_specs=pl.BlockSpec((TB, out_pad), lambda i: (i, 0)),
        compiler_params=pltpu.CompilerParams(
            dimension_semantics=("parallel",),
        ),
    )(*flat_inputs)

    return out_p[:B, :output_dim]


# -----------------------------------------------------------------------------
# Parameter init (mirrors DeepLayer.__init__ / _init_weight)
# -----------------------------------------------------------------------------
def xavier_normal(key, out_size, in_size, dtype=jnp.float32):
    """Matches torch.nn.init.xavier_normal_ for a (out, in) Linear weight."""
    std = (2.0 / (in_size + out_size)) ** 0.5
    return std * jax.random.normal(key, (out_size, in_size), dtype=dtype)


def init_deep_layer_params(key, layers, output_dim, dtype=jnp.float32):
    """Returns list of (w_t, b, apply_relu) with w_t already (in, out), unpadded."""
    params = []
    keys = jax.random.split(key, len(layers))  # len(layers)-1 hidden + 1 output
    for idx, (in_size, out_size) in enumerate(zip(layers[:-1], layers[1:])):
        w = xavier_normal(keys[idx], out_size, in_size, dtype)  # (out, in)
        b = jnp.zeros((1, out_size), dtype=dtype)
        params.append((w.T, b, True))
    w_out = xavier_normal(keys[-1], output_dim, layers[-1], dtype)
    b_out = jnp.zeros((1, output_dim), dtype=dtype)
    params.append((w_out.T, b_out, False))
    return params


def pad_params(params, lane=128):
    """Zero-pad every weight/bias so all feature dims are multiples of `lane`."""
    ws_p, bs_p = [], []
    for w_t, b, _ in params:
        din, dout = w_t.shape
        din_p, dout_p = _round_up(din, lane), _round_up(dout, lane)
        w_pad = jnp.zeros((din_p, dout_p), w_t.dtype).at[:din, :dout].set(w_t)
        b_pad = jnp.zeros((1, dout_p), b.dtype).at[:, :dout].set(b)
        ws_p.append(w_pad)
        bs_p.append(b_pad)
    return tuple(ws_p), tuple(bs_p)


# -----------------------------------------------------------------------------
# Plain-JAX reference of the same math (unpadded)
# -----------------------------------------------------------------------------
def reference_forward(x, params):
    h = x
    for w_t, b, apply_relu in params:
        h = h @ w_t + b
        if apply_relu:
            h = jnp.maximum(h, 0.0)
    return h


if __name__ == "__main__":
    key = jax.random.PRNGKey(0)
    k_x, k_x2, k_p = jax.random.split(key, 3)

    # Shapes consistent with the module: layers=[32, 64, 32], output_dim=16
    layers = [32, 64, 32]
    output_dim = 16

    params = init_deep_layer_params(k_p, layers, output_dim)
    ws_p, bs_p = pad_params(params)

    # --- small batch (as in the module's typical usage) ---------------------
    batch = 8
    x = jax.random.normal(k_x, (batch, layers[0]), dtype=jnp.float32)
    out = deep_layer_forward(x, ws_p, bs_p, output_dim=output_dim)
    out = jax.block_until_ready(out)
    ref = reference_forward(x, params)
    assert out.shape == (batch, output_dim)
    assert jnp.allclose(out, ref, atol=1e-5, rtol=1e-5)

    # --- larger batch: exercises batch tiling / grid > 1 / padded-row masking
    batch2 = 260
    x2 = jax.random.normal(k_x2, (batch2, layers[0]), dtype=jnp.float32)
    out2 = deep_layer_forward(x2, ws_p, bs_p, output_dim=output_dim)
    out2 = jax.block_until_ready(out2)
    ref2 = reference_forward(x2, params)
    assert out2.shape == (batch2, output_dim)
    assert jnp.allclose(out2, ref2, atol=1e-5, rtol=1e-5)

    print("KERNEL_OK")
</pallas_src>

<mosaic_0001>
module attributes {stable_mosaic.version = 11 : i64} {
  func.func @_fused_mlp_kernel(%arg0: i32, %arg1: memref<8x128xf32, #tpu.memory_space<vmem>>, %arg2: memref<128x128xf32, #tpu.memory_space<vmem>>, %arg3: memref<1x128xf32, #tpu.memory_space<vmem>>, %arg4: memref<128x128xf32, #tpu.memory_space<vmem>>, %arg5: memref<1x128xf32, #tpu.memory_space<vmem>>, %arg6: memref<128x128xf32, #tpu.memory_space<vmem>>, %arg7: memref<1x128xf32, #tpu.memory_space<vmem>>, %arg8: memref<8x128xf32, #tpu.memory_space<vmem>>) attributes {dimension_semantics = [#tpu.dimension_semantics<parallel>], iteration_bounds = array<i64: 1>, scalar_prefetch = 0 : i64, scratch_operands = 0 : i64, tpu.core_type = #tpu.core_type<tc>, window_params = [{transform_indices = @transform_0, window_bounds = array<i64: 8, 128>}, {pipeline_mode = #tpu.pipeline_mode<synchronous>, transform_indices = @transform_1, window_bounds = array<i64: 128, 128>}, {pipeline_mode = #tpu.pipeline_mode<synchronous>, transform_indices = @transform_2, window_bounds = array<i64: 1, 128>}, {pipeline_mode = #tpu.pipeline_mode<synchronous>, transform_indices = @transform_3, window_bounds = array<i64: 128, 128>}, {pipeline_mode = #tpu.pipeline_mode<synchronous>, transform_indices = @transform_4, window_bounds = array<i64: 1, 128>}, {pipeline_mode = #tpu.pipeline_mode<synchronous>, transform_indices = @transform_5, window_bounds = array<i64: 128, 128>}, {pipeline_mode = #tpu.pipeline_mode<synchronous>, transform_indices = @transform_6, window_bounds = array<i64: 1, 128>}, {transform_indices = @transform_7, window_bounds = array<i64: 8, 128>}]} {
    %c0 = arith.constant 0 : index
    %c0_0 = arith.constant 0 : index
    %0 = vector.load %arg1[%c0, %c0_0] : memref<8x128xf32, #tpu.memory_space<vmem>>, vector<8x128xf32>
    %c0_1 = arith.constant 0 : index
    %c0_2 = arith.constant 0 : index
    %1 = vector.load %arg2[%c0_1, %c0_2] : memref<128x128xf32, #tpu.memory_space<vmem>>, vector<128x128xf32>
    %c0_3 = arith.constant 0 : index
    %c0_4 = arith.constant 0 : index
    %2 = vector.load %arg3[%c0_3, %c0_4] : memref<1x128xf32, #tpu.memory_space<vmem>>, vector<1x128xf32>
    %cst = arith.constant dense<0.000000e+00> : vector<8x128xf32>
    %3 = tpu.matmul %0, %1, %cst {dimension_numbers = #tpu.dot_dimension_numbers<[1], [0], [0], [1], [0, 0, 1, 1], [], []>} : vector<8x128xf32>, vector<128x128xf32>, vector<8x128xf32> -> vector<8x128xf32>
    %4 = vector.broadcast %2 : vector<1x128xf32> to vector<8x128xf32>
    %5 = arith.addf %3, %4 : vector<8x128xf32>
    %cst_5 = arith.constant 0.000000e+00 : f32
    %6 = vector.broadcast %cst_5 : f32 to vector<8x128xf32>
    %7 = arith.maximumf %5, %6 : vector<8x128xf32>
    %c0_6 = arith.constant 0 : index
    %c0_7 = arith.constant 0 : index
    %8 = vector.load %arg4[%c0_6, %c0_7] : memref<128x128xf32, #tpu.memory_space<vmem>>, vector<128x128xf32>
    %c0_8 = arith.constant 0 : index
    %c0_9 = arith.constant 0 : index
    %9 = vector.load %arg5[%c0_8, %c0_9] : memref<1x128xf32, #tpu.memory_space<vmem>>, vector<1x128xf32>
    %cst_10 = arith.constant dense<0.000000e+00> : vector<8x128xf32>
    %10 = tpu.matmul %7, %8, %cst_10 {dimension_numbers = #tpu.dot_dimension_numbers<[1], [0], [0], [1], [0, 0, 1, 1], [], []>} : vector<8x128xf32>, vector<128x128xf32>, vector<8x128xf32> -> vector<8x128xf32>
    %11 = vector.broadcast %9 : vector<1x128xf32> to vector<8x128xf32>
    %12 = arith.addf %10, %11 : vector<8x128xf32>
    %cst_11 = arith.constant 0.000000e+00 : f32
    %13 = vector.broadcast %cst_11 : f32 to vector<8x128xf32>
    %14 = arith.maximumf %12, %13 : vector<8x128xf32>
    %c0_12 = arith.constant 0 : index
    %c0_13 = arith.constant 0 : index
    %15 = vector.load %arg6[%c0_12, %c0_13] : memref<128x128xf32, #tpu.memory_space<vmem>>, vector<128x128xf32>
    %c0_14 = arith.constant 0 : index
    %c0_15 = arith.constant 0 : index
    %16 = vector.load %arg7[%c0_14, %c0_15] : memref<1x128xf32, #tpu.memory_space<vmem>>, vector<1x128xf32>
    %cst_16 = arith.constant dense<0.000000e+00> : vector<8x128xf32>
    %17 = tpu.matmul %14, %15, %cst_16 {dimension_numbers = #tpu.dot_dimension_numbers<[1], [0], [0], [1], [0, 0, 1, 1], [], []>} : vector<8x128xf32>, vector<128x128xf32>, vector<8x128xf32> -> vector<8x128xf32>
    %18 = vector.broadcast %16 : vector<1x128xf32> to vector<8x128xf32>
    %19 = arith.addf %17, %18 : vector<8x128xf32>
    %c0_17 = arith.constant 0 : index
    %c0_18 = arith.constant 0 : index
    %20 = vector.load %arg8[%c0_17, %c0_18] : memref<8x128xf32, #tpu.memory_space<vmem>>, vector<8x128xf32>
    tpu.vector_store %arg8[%c0_17, %c0_18], %19 {strides = array<i32>} : memref<8x128xf32, #tpu.memory_space<vmem>>, vector<8x128xf32>,
    return
  }
  func.func @transform_0(%arg0: i32) -> (i32, i32) {
    %c0_i32 = arith.constant 0 : i32
    %c0_i32_0 = arith.constant 0 : i32
    return %arg0, %c0_i32 : i32, i32
  }
  func.func @transform_1(%arg0: i32) -> (i32, i32) {
    %c0_i32 = arith.constant 0 : i32
    %c0_i32_0 = arith.constant 0 : i32
    %c0_i32_1 = arith.constant 0 : i32
    return %c0_i32, %c0_i32_0 : i32, i32
  }
  func.func @transform_2(%arg0: i32) -> (i32, i32) {
    %c0_i32 = arith.constant 0 : i32
    %c0_i32_0 = arith.constant 0 : i32
    %c0_i32_1 = arith.constant 0 : i32
    return %c0_i32, %c0_i32_0 : i32, i32
  }
  func.func @transform_3(%arg0: i32) -> (i32, i32) {
    %c0_i32 = arith.constant 0 : i32
    %c0_i32_0 = arith.constant 0 : i32
    %c0_i32_1 = arith.constant 0 : i32
    return %c0_i32, %c0_i32_0 : i32, i32
  }
  func.func @transform_4(%arg0: i32) -> (i32, i32) {
    %c0_i32 = arith.constant 0 : i32
    %c0_i32_0 = arith.constant 0 : i32
    %c0_i32_1 = arith.constant 0 : i32
    return %c0_i32, %c0_i32_0 : i32, i32
  }
  func.func @transform_5(%arg0: i32) -> (i32, i32) {
    %c0_i32 = arith.constant 0 : i32
    %c0_i32_0 = arith.constant 0 : i32
    %c0_i32_1 = arith.constant 0 : i32
    return %c0_i32, %c0_i32_0 : i32, i32
  }
  func.func @transform_6(%arg0: i32) -> (i32, i32) {
    %c0_i32 = arith.constant 0 : i32
    %c0_i32_0 = arith.constant 0 : i32
    %c0_i32_1 = arith.constant 0 : i32
    return %c0_i32, %c0_i32_0 : i32, i32
  }
  func.func @transform_7(%arg0: i32) -> (i32, i32) {
    %c0_i32 = arith.constant 0 : i32
    %c0_i32_0 = arith.constant 0 : i32
    return %arg0, %c0_i32 : i32, i32
  }
}

</mosaic_0001>

<llo_original>
// kernel: deep_layer_forward.1
$region0: #{deep_layer_forward.1}
  #allocation0 [shape = 'u32[]', space=smem, size = 0x4, offset = 0x4, fixed_abs, tag = 'smem constant byte address 0x4 - core index']
  #allocation1 [shape = 'u32[72,128]{1,0:T(1,128)}', space=vmem, size = 0x9000, scoped, tag = 'internal scratch']
  %s0 = inlined_call_operand.vmem [shape: f32[8,128], index: 0, kind: input, shape index: {}]
  %s1 = inlined_call_operand.hbm [shape: f32[128,128], index: 1, kind: input, shape index: {}]
  %s2 = inlined_call_operand.vmem [shape: f32[1,128], index: 2, kind: input, shape index: {}]
  %s3 = inlined_call_operand.hbm [shape: f32[128,128], index: 3, kind: input, shape index: {}]
  %s4 = inlined_call_operand.vmem [shape: f32[1,128], index: 4, kind: input, shape index: {}]
  %s5 = inlined_call_operand.hbm [shape: f32[128,128], index: 5, kind: input, shape index: {}]
  %s6 = inlined_call_operand.vmem [shape: f32[1,128], index: 6, kind: input, shape index: {}]
  %s7 = inlined_call_operand.hbm [shape: f32[8,128], index: 7, kind: output, shape index: {}]
  %s8 = sld [smem:[#allocation0]]
  $region50: #{deep_layer_forward.1} parent=0
    _
  %s10 = ssub.s32 1, %s8
  %s11 = scalar_select 0, %s10, %s8
  $region1: #{deep_layer_forward.1} parent=0
    #allocation2 [shape = 'u8[65536]{0}', space=vmem, size = 0x10000, scoped, tag = 'input window, operand 1, single buffered']
    #allocation3 [shape = 's32[1]{0}', space=sflag, size = 0x4, scoped, tag = 'scoped memory for deep_layer_forward.1']
    #allocation4 [shape = 's32[1]{0}', space=sflag, size = 0x4, scoped, tag = 'scoped memory for deep_layer_forward.1']
    #allocation5 [shape = 'u8[65536]{0}', space=vmem, size = 0x10000, scoped, tag = 'input window, operand 3, single buffered']
    #allocation6 [shape = 's32[1]{0}', space=sflag, size = 0x4, scoped, tag = 'scoped memory for deep_layer_forward.1']
    #allocation7 [shape = 'u8[65536]{0}', space=vmem, size = 0x10000, scoped, tag = 'input window, operand 5, single buffered']
    #allocation8 [shape = 'u8[4096]{0}', space=vmem, size = 0x1000, scoped, tag = 'output window, operand 0, single buffered']
    %12 = vsyncpa [#allocation3], 0
    %13 = vsyncpa [#allocation6], 0
    %14 = vsyncpa [#allocation4], 0
    // Predicated region
    $region2: #{deep_layer_forward.1} parent=1 // pred_check
      _
    $region3: #{deep_layer_forward.1} parent=1 // pred_check_branch
      %16 = sbr.rel (0) target = $region5
    $region4: #{deep_layer_forward.1} parent=1 // pred_region
      _
    $region5: #{deep_layer_forward.1} parent=1 // pred_fallthru
      _
    // Predicated region
    $region6: #{deep_layer_forward.1} parent=1 // pred_check
      _
    $region7: #{deep_layer_forward.1} parent=1 // pred_check_branch
      %18 = sbr.rel (0) target = $region9
    $region8: #{deep_layer_forward.1} parent=1 // pred_region
      %20 = vsyncadd [#allocation3], 0
      %s21 = sshll.u32 %s1, 4
      %s22 = int_to_ptr.hbm [resolvable:$true] %s21
      %s23 = sshll.u32 [#allocation2], 4
      %s24 = int_to_ptr.vmem [resolvable:$true] %s23
      %29 = dma.hbm_to_vmem [thread:$0]  %s22, 2048, %s24, [#allocation3], 128, 128, 8
    $region9: #{deep_layer_forward.1} parent=1 // pred_fallthru
      _
    // Predicated region
    $region10: #{deep_layer_forward.1} parent=1 // pred_check
      _
    $region11: #{deep_layer_forward.1} parent=1 // pred_check_branch
      %31 = sbr.rel (0) target = $region13
    $region12: #{deep_layer_forward.1} parent=1 // pred_region
      _
    $region13: #{deep_layer_forward.1} parent=1 // pred_fallthru
      _
    // Predicated region
    $region14: #{deep_layer_forward.1} parent=1 // pred_check
      _
    $region15: #{deep_layer_forward.1} parent=1 // pred_check_branch
      %33 = sbr.rel (0) target = $region17
    $region16: #{deep_layer_forward.1} parent=1 // pred_region
      %35 = vsyncadd [#allocation6], 0
      %s36 = sshll.u32 %s3, 4
      %s37 = int_to_ptr.hbm [resolvable:$true] %s36
      %s38 = sshll.u32 [#allocation5], 4
      %s39 = int_to_ptr.vmem [resolvable:$true] %s38
      %44 = dma.hbm_to_vmem [thread:$0]  %s37, 2048, %s39, [#allocation6], 128, 128, 8
    $region17: #{deep_layer_forward.1} parent=1 // pred_fallthru
      _
    // Predicated region
    $region18: #{deep_layer_forward.1} parent=1 // pred_check
      _
    $region19: #{deep_layer_forward.1} parent=1 // pred_check_branch
      %46 = sbr.rel (0) target = $region21
    $region20: #{deep_layer_forward.1} parent=1 // pred_region
      _
    $region21: #{deep_layer_forward.1} parent=1 // pred_fallthru
      _
    // Predicated region
    $region22: #{deep_layer_forward.1} parent=1 // pred_check
      _
    $region23: #{deep_layer_forward.1} parent=1 // pred_check_branch
      %48 = sbr.rel (0) target = $region25
    $region24: #{deep_layer_forward.1} parent=1 // pred_region
      %50 = vsyncadd [#allocation6], 0
      %s51 = sshll.u32 %s5, 4
      %s52 = int_to_ptr.hbm [resolvable:$true] %s51
      %s53 = sshll.u32 [#allocation7], 4
      %s54 = int_to_ptr.vmem [resolvable:$true] %s53
      %59 = dma.hbm_to_vmem [thread:$0]  %s52, 2048, %s54, [#allocation6], 128, 128, 8
    $region25: #{deep_layer_forward.1} parent=1 // pred_fallthru
      _
    // Predicated region
    $region26: #{deep_layer_forward.1} parent=1 // pred_check
      _
    $region27: #{deep_layer_forward.1} parent=1 // pred_check_branch
      %61 = sbr.rel (0) target = $region29
    $region28: #{deep_layer_forward.1} parent=1 // pred_region
      _
    $region29: #{deep_layer_forward.1} parent=1 // pred_fallthru
      _
    // Predicated region
    $region30: #{deep_layer_forward.1} parent=1 // pred_check
      _
    $region31: #{deep_layer_forward.1} parent=1 // pred_check_branch
      %63 = sbr.rel (0) target = $region33
    $region32: #{deep_layer_forward.1} parent=1 // pred_region
      %65 = dma.done [#allocation3], 2048
    $region33: #{deep_layer_forward.1} parent=1 // pred_fallthru
      _
    // Predicated region
    $region34: #{deep_layer_forward.1} parent=1 // pred_check
      _
    $region35: #{deep_layer_forward.1} parent=1 // pred_check_branch
      %67 = sbr.rel (0) target = $region37
    $region36: #{deep_layer_forward.1} parent=1 // pred_region
      %69 = dma.done [#allocation6], 2048
    $region37: #{deep_layer_forward.1} parent=1 // pred_fallthru
      _
    // Predicated region
    $region38: #{deep_layer_forward.1} parent=1 // pred_check
      _
    $region39: #{deep_layer_forward.1} parent=1 // pred_check_branch
      %71 = sbr.rel (0) target = $region41
    $region40: #{deep_layer_forward.1} parent=1 // pred_region
      %73 = dma.done [#allocation6], 2048
    $region41: #{deep_layer_forward.1} parent=1 // pred_fallthru
      _
    %v74 = vld [vmem:[%s0] sm:$0xff]
    %v75 = vld [vmem:[#allocation2] sm:$0xff]
    %v76 = vld [vmem:[#allocation2 + $0x8] sm:$0xff]
    %v77 = vld [vmem:[#allocation2 + $0x10] sm:$0xff]
    %v78 = vld [vmem:[#allocation2 + $0x18] sm:$0xff]
    %v79 = vld [vmem:[#allocation2 + $0x20] sm:$0xff]
    %v80 = vld [vmem:[#allocation2 + $0x28] sm:$0xff]
    %v81 = vld [vmem:[#allocation2 + $0x30] sm:$0xff]
    %v82 = vld [vmem:[#allocation2 + $0x38] sm:$0xff]
    %v83 = vld [vmem:[#allocation2 + $0x40] sm:$0xff]
    %v84 = vld [vmem:[#allocation2 + $0x48] sm:$0xff]
    %v85 = vld [vmem:[#allocation2 + $0x50] sm:$0xff]
    %v86 = vld [vmem:[#allocation2 + $0x58] sm:$0xff]
    %v87 = vld [vmem:[#allocation2 + $0x60] sm:$0xff]
    %v88 = vld [vmem:[#allocation2 + $0x68] sm:$0xff]
    %v89 = vld [vmem:[#allocation2 + $0x70] sm:$0xff]
    %v90 = vld [vmem:[#allocation2 + $0x78] sm:$0xff]
    %v91 = vld [vmem:[%s2] sm:$0x1]
    %v93 = vperm.slane %v91, 0
    %95 = vmatpush.msra.mxu0 %v90
    %96 = vmatpush.msra.mxu0 %v89
    %97 = vmatpush.msra.mxu0 %v88
    %98 = vmatpush.msra.mxu0 %v87
    %99 = vmatpush.msra.mxu0 %v86
    %100 = vmatpush.msra.mxu0 %v85
    %101 = vmatpush.msra.mxu0 %v84
    %102 = vmatpush.msra.mxu0 %v83
    %103 = vmatpush.msra.mxu0 %v82
    %104 = vmatpush.msra.mxu0 %v81
    %105 = vmatpush.msra.mxu0 %v80
    %106 = vmatpush.msra.mxu0 %v79
    %107 = vmatpush.msra.mxu0 %v78
    %108 = vmatpush.msra.mxu0 %v77
    %109 = vmatpush.msra.mxu0 %v76
    %110 = vmatpush.msra.mxu0 %v75
    %111 = vmatmul.f32.gmra.mxu0 %v74
    %v112 = vpop.f32.mrf.mxu0
    %v113 = vadd.f32 %v93, %v112
    %114 = vdwg.mxu0
    %v115 = vmax.f32 %v113, 0.0
    %v116 = vld [vmem:[#allocation5] sm:$0xff]
    %v117 = vld [vmem:[#allocation5 + $0x8] sm:$0xff]
    %v118 = vld [vmem:[#allocation5 + $0x10] sm:$0xff]
    %v119 = vld [vmem:[#allocation5 + $0x18] sm:$0xff]
    %v120 = vld [vmem:[#allocation5 + $0x20] sm:$0xff]
    %v121 = vld [vmem:[#allocation5 + $0x28] sm:$0xff]
    %v122 = vld [vmem:[#allocation5 + $0x30] sm:$0xff]
    %v123 = vld [vmem:[#allocation5 + $0x38] sm:$0xff]
    %v124 = vld [vmem:[#allocation5 + $0x40] sm:$0xff]
    %v125 = vld [vmem:[#allocation5 + $0x48] sm:$0xff]
    %v126 = vld [vmem:[#allocation5 + $0x50] sm:$0xff]
    %v127 = vld [vmem:[#allocation5 + $0x58] sm:$0xff]
    %v128 = vld [vmem:[#allocation5 + $0x60] sm:$0xff]
    %v129 = vld [vmem:[#allocation5 + $0x68] sm:$0xff]
    %v130 = vld [vmem:[#allocation5 + $0x70] sm:$0xff]
    %v131 = vld [vmem:[#allocation5 + $0x78] sm:$0xff]
    %v132 = vld [vmem:[%s4] sm:$0x1]
    %v134 = vperm.slane %v132, 0
    %136 = vmatpush.msra.mxu0 %v131
    %137 = vmatpush.msra.mxu0 %v130
    %138 = vmatpush.msra.mxu0 %v129
    %139 = vmatpush.msra.mxu0 %v128
    %140 = vmatpush.msra.mxu0 %v127
    %141 = vmatpush.msra.mxu0 %v126
    %142 = vmatpush.msra.mxu0 %v125
    %143 = vmatpush.msra.mxu0 %v124
    %144 = vmatpush.msra.mxu0 %v123
    %145 = vmatpush.msra.mxu0 %v122
    %146 = vmatpush.msra.mxu0 %v121
    %147 = vmatpush.msra.mxu0 %v120
    %148 = vmatpush.msra.mxu0 %v119
    %149 = vmatpush.msra.mxu0 %v118
    %150 = vmatpush.msra.mxu0 %v117
    %151 = vmatpush.msra.mxu0 %v116
    %152 = vmatmul.f32.gmra.mxu0 %v115
    %v153 = vpop.f32.mrf.mxu0
    %v154 = vadd.f32 %v134, %v153
    %155 = vdwg.mxu0
    %v156 = vmax.f32 %v154, 0.0
    %v157 = vld [vmem:[#allocation7] sm:$0xff]
    %v158 = vld [vmem:[#allocation7 + $0x8] sm:$0xff]
    %v159 = vld [vmem:[#allocation7 + $0x10] sm:$0xff]
    %v160 = vld [vmem:[#allocation7 + $0x18] sm:$0xff]
    %v161 = vld [vmem:[#allocation7 + $0x20] sm:$0xff]
    %v162 = vld [vmem:[#allocation7 + $0x28] sm:$0xff]
    %v163 = vld [vmem:[#allocation7 + $0x30] sm:$0xff]
    %v164 = vld [vmem:[#allocation7 + $0x38] sm:$0xff]
    %v165 = vld [vmem:[#allocation7 + $0x40] sm:$0xff]
    %v166 = vld [vmem:[#allocation7 + $0x48] sm:$0xff]
    %v167 = vld [vmem:[#allocation7 + $0x50] sm:$0xff]
    %v168 = vld [vmem:[#allocation7 + $0x58] sm:$0xff]
    %v169 = vld [vmem:[#allocation7 + $0x60] sm:$0xff]
    %v170 = vld [vmem:[#allocation7 + $0x68] sm:$0xff]
    %v171 = vld [vmem:[#allocation7 + $0x70] sm:$0xff]
    %v172 = vld [vmem:[#allocation7 + $0x78] sm:$0xff]
    %v173 = vld [vmem:[%s6] sm:$0x1]
    %v175 = vperm.slane %v173, 0
    %177 = vmatpush.msra.mxu0 %v172
    %178 = vmatpush.msra.mxu0 %v171
    %179 = vmatpush.msra.mxu0 %v170
    %180 = vmatpush.msra.mxu0 %v169
    %181 = vmatpush.msra.mxu0 %v168
    %182 = vmatpush.msra.mxu0 %v167
    %183 = vmatpush.msra.mxu0 %v166
    %184 = vmatpush.msra.mxu0 %v165
    %185 = vmatpush.msra.mxu0 %v164
    %186 = vmatpush.msra.mxu0 %v163
    %187 = vmatpush.msra.mxu0 %v162
    %188 = vmatpush.msra.mxu0 %v161
    %189 = vmatpush.msra.mxu0 %v160
    %190 = vmatpush.msra.mxu0 %v159
    %191 = vmatpush.msra.mxu0 %v158
    %192 = vmatpush.msra.mxu0 %v157
    %193 = vmatmul.f32.gmra.mxu0 %v156
    %v194 = vpop.f32.mrf.mxu0
    %v195 = vadd.f32 %v175, %v194
    %196 = vdwg.mxu0
    %197 = vst [vmem:[#allocation8] sm:$0xff] %v195
    // Predicated region
    $region42: #{deep_layer_forward.1} parent=1 // pred_check
      _
    $region43: #{deep_layer_forward.1} parent=1 // pred_check_branch
      %199 = sbr.rel (0) target = $region45
    $region44: #{deep_layer_forward.1} parent=1 // pred_region
      %201 = vsyncadd [#allocation4], 0
      %s203 = sshll.u32 [#allocation8], 4
      %s204 = int_to_ptr.vmem [resolvable:$true] %s203
      %s205 = sshll.u32 %s7, 4
      %s206 = int_to_ptr.hbm [resolvable:$true] %s205
      %208 = dma.vmem_to_hbm [thread:$0]  %s204, 128, %s206, [#allocation4]
    $region45: #{deep_layer_forward.1} parent=1 // pred_fallthru
      _
    // Predicated region
    $region46: #{deep_layer_forward.1} parent=1 // pred_check
      _
    $region47: #{deep_layer_forward.1} parent=1 // pred_check_branch
      %210 = sbr.rel (0) target = $region49
    $region48: #{deep_layer_forward.1} parent=1 // pred_region
      %212 = dma.done [#allocation4], 128
    $region49: #{deep_layer_forward.1} parent=1 // pred_fallthru
      _
    %213 = vsyncpa [#allocation3], 1
    %214 = vsyncpa [#allocation6], 1
    %215 = vsyncpa [#allocation4], 1

</llo_original>
